<compile_context>
chip_gen: v7x
topology: tpu7x:2x2x1
jax: 0.10.0
libtpu: 0.0.40
codegen_flags: <defaults>
</compile_context>

<pallas_src>
import jax
import jax.numpy as jnp
from jax import lax
from jax.experimental import pallas as pl
from jax.experimental.pallas import tpu as pltpu


# ----------------------------------------------------------------------------- 
# In-kernel math
# -----------------------------------------------------------------------------
def _divergence_tile(f0, row_before, row_after, f1, m, r0, H):
    """All inputs f32.  f0/f1/m: (bt, TH, W); row_before/row_after: (bt, 1, W)
    are the clamped H-neighbours of the tile's first/last row.  r0 is the global
    row index of tile row 0.  Returns f32 (bt, TH, W) = divergence * mask."""
    _, TH, W = f0.shape
    one, half = jnp.float32(1.0), jnp.float32(0.5)

    # ---- d/dH: sublane rotate (XLU) + edge-row patch + broadcastable scale ----
    lrow = lax.broadcasted_iota(jnp.int32, (1, TH, 1), 1)
    f0_up = jnp.where(lrow == TH - 1, row_after, pltpu.roll(f0, TH - 1, axis=1))
    f0_dn = jnp.where(lrow == 0, row_before, pltpu.roll(f0, 1, axis=1))
    grow = r0 + lrow                                    # global row index
    scale_h = jnp.where((grow == 0) | (grow == H - 1), one, half)
    div = (f0_up - f0_dn) * scale_h

    # ---- d/dW: lane rotate + edge-column patch (W is never tiled) ----
    lcol = lax.broadcasted_iota(jnp.int32, (1, 1, W), 2)
    f1_rt = jnp.where(lcol == W - 1, f1[:, :, W - 1:], pltpu.roll(f1, W - 1, axis=2))
    f1_lt = jnp.where(lcol == 0, f1[:, :, :1], pltpu.roll(f1, 1, axis=2))
    scale_w = jnp.where((lcol == 0) | (lcol == W - 1), one, half)
    div = div + (f1_rt - f1_lt) * scale_w

    return div * m


def _make_divergence_kernel(*, merged, tiled, offs, H):
    """Builds the kernel body.

    Ref order: [x] (merged) or [f0, f1, mask] (split), then [halo_above8,
    halo_below8] if H-tiled, then the output ref.  All blocks are (bt, TH, W)
    except the halo blocks which are (bt, 8, W)."""
    f32 = jnp.float32

    def kernel(*refs):
        o_ref = refs[-1]
        TH = o_ref.shape[1]
        if tiled:
            b8_ref, a8_ref = refs[-3], refs[-2]
            data_refs = refs[:-3]
        else:
            data_refs = refs[:-1]

        if merged:
            (x_ref,) = data_refs                      # (bt, 3, TH, W)
            f0 = x_ref[:, offs[0]].astype(f32)
            f1 = x_ref[:, offs[1]].astype(f32)
            m = x_ref[:, offs[2]].astype(f32)
        else:
            f0_ref, f1_ref, m_ref = data_refs
            f0 = f0_ref[...].astype(f32)
            f1 = f1_ref[...].astype(f32)
            m = m_ref[...].astype(f32)

        if tiled:
            h = pl.program_id(1)
            r0 = h * TH
            # Clamped neighbours: at the array boundary reuse the tile's own edge
            # row, otherwise the adjacent row DMA'd in the 8-row halo block.
            row_before = jnp.where(h == 0, f0[:, :1, :],
                                   b8_ref[:, 7:8, :].astype(f32))
            row_after = jnp.where(h == pl.num_programs(1) - 1,
                                  f0[:, TH - 1:, :],
                                  a8_ref[:, :1, :].astype(f32))
        else:
            r0 = 0
            row_before = f0[:, :1, :]
            row_after = f0[:, TH - 1:, :]

        div = _divergence_tile(f0, row_before, row_after, f1, m, r0, H)
        o_ref[...] = div.astype(o_ref.dtype)

    return kernel


# ----------------------------------------------------------------------------- 
# Tiling / VMEM policy (generation aware)
# -----------------------------------------------------------------------------
def _vmem_capacity_bytes():
    default = 64 * 1024 * 1024          # conservative (v7x per-TC VMEM)
    try:
        info = pltpu.get_tpu_info()
        cap = int(getattr(info, "vmem_capacity_bytes", default))
        return cap if cap > 0 else default
    except Exception:
        return default


def _choose_h_tile(B, H, W, elem, target_tile):
    """Largest multiple-of-8 divisor of H whose (TH, W) tile fits the per-tile
    byte target, providing >=4 total grid steps when the batch alone cannot."""
    if H % 8 != 0:
        return H                                        # (8,128) rule: full dim
    cands = sorted({t for t in range(8, H + 1, 8) if H % t == 0}, reverse=True)
    if not cands:
        return H
    plane = H * W * elem
    need_h_steps = 1
    if B < 4 and plane > max(target_tile, 1 << 20):
        need_h_steps = min(-(-4 // B), H // 8)          # ceil(4/B), capped
    for t in cands:                                     # largest first
        if t * W * elem <= target_tile and (H // t) >= need_h_steps:
            return t
    return cands[-1]


def _choose_batch_tile(B, nh, th, W, elem, target_tile, vmem_limit):
    """Largest divisor of B that keeps the per-step tile under the byte target /
    VMEM budget while leaving >=4 total grid steps when achievable."""
    tile = th * W * elem
    # double-buffered (3 in + 1 out) blocks + ~6 live f32 temporaries per plane
    per_b = th * W * (8 * elem + 2 * elem + 6 * 4)
    need_steps = min(4, B * nh)
    for d in sorted((d for d in range(1, B + 1) if B % d == 0), reverse=True):
        if d * tile > target_tile:
            continue
        if d * per_b > int(vmem_limit * 0.9):
            continue
        if (B // d) * nh >= need_steps:
            return d
    return 1


# ----------------------------------------------------------------------------- 
# Public wrapper
# -----------------------------------------------------------------------------
def divergence_forward(x, div_channels, mask_channel, *, h_tile=None, batch_tile=None):
    """x: (B, C, H, W) NCHW.  Returns (B, 1, H, W) = divergence * mask."""
    assert len(div_channels) == 2, "2 spatial dims => exactly 2 div channels"
    B, C, H, W = x.shape
    assert H >= 2 and W >= 2, "torch.gradient needs at least 2 samples per dim"
    c0, c1, cm = int(div_channels[0]), int(div_channels[1]), int(mask_channel)
    elem = jnp.dtype(x.dtype).itemsize

    cap = _vmem_capacity_bytes()
    vmem_limit = max(min(cap * 3 // 4, cap - (8 << 20)), 16 << 20)
    target_tile = min(max(cap // 32, 1 << 20), 8 << 20)

    th = int(h_tile) if h_tile is not None else _choose_h_tile(B, H, W, elem, target_tile)
    assert H % th == 0 and (th == H or th % 8 == 0), "h_tile must divide H, 8-aligned"
    nh = H // th
    bt = (int(batch_tile) if batch_tile is not None
          else _choose_batch_tile(B, nh, th, W, elem, target_tile, vmem_limit))
    assert B % bt == 0
    nb = B // bt
    tiled = th < H

    # Contiguous 3-aligned channel group -> one DMA descriptor per step.
    chans = (c0, c1, cm)
    cmin = min(chans)
    merged = sorted(set(chans)) == [cmin, cmin + 1, cmin + 2] and cmin % 3 == 0

    if merged:
        in_specs = [pl.BlockSpec((bt, 3, th, W),
                                 lambda b, h: (b, cmin // 3, h, 0))]
        offs = (c0 - cmin, c1 - cmin, cm - cmin)
        nargs = 1
    else:
        def tile_spec(ch):
            return pl.BlockSpec((bt, None, th, W),
                                lambda b, h, c=ch: (b, c, h, 0))
        in_specs = [tile_spec(c0), tile_spec(c1), tile_spec(cm)]
        offs = None
        nargs = 3

    if tiled:
        k8 = th // 8
        ng8 = H // 8
        # 8-row halo blocks of the d/dH channel just above / below the tile
        # (clamped at the array boundary inside the index_map).
        in_specs += [
            pl.BlockSpec((bt, None, 8, W),
                         lambda b, h: (b, c0, jnp.maximum(h * k8 - 1, 0), 0)),
            pl.BlockSpec((bt, None, 8, W),
                         lambda b, h: (b, c0, jnp.minimum((h + 1) * k8, ng8 - 1), 0)),
        ]
        nargs += 2

    out_spec = pl.BlockSpec((bt, None, th, W), lambda b, h: (b, 0, h, 0))

    kernel = _make_divergence_kernel(merged=merged, tiled=tiled, offs=offs, H=H)

    cost = pl.CostEstimate(
        flops=6 * B * H * W,
        transcendentals=0,
        bytes_accessed=4 * B * H * W * elem,    # 3 channel reads + 1 write
    )

    call = pl.pallas_call(
        kernel,
        out_shape=jax.ShapeDtypeStruct((B, 1, H, W), x.dtype),
        grid=(nb, nh),
        in_specs=in_specs,
        out_specs=out_spec,
        compiler_params=pltpu.CompilerParams(
            dimension_semantics=("parallel", "parallel"),
            vmem_limit_bytes=int(vmem_limit),
        ),
        cost_estimate=cost,
    )
    return call(*([x] * nargs))


# ----------------------------------------------------------------------------- 
# Pure-JAX reference (torch_divergence(indexing='ij') * mask)
# -----------------------------------------------------------------------------
def _reference_forward(x, div_channels, mask_channel):
    xf = x.astype(jnp.float32)
    f0 = xf[:, div_channels[0]]
    f1 = xf[:, div_channels[1]]
    div = jnp.gradient(f0, axis=1) + jnp.gradient(f1, axis=2)
    return (div * xf[:, mask_channel])[:, None, :, :].astype(x.dtype)


if __name__ == "__main__":
    key = jax.random.PRNGKey(0)
    k1, k2, k3 = jax.random.split(key, 3)

    # Test 1: merged contiguous-channel path, no H tiling (B=2, C=4, 16x128, f32).
    x1 = jax.random.normal(k1, (2, 4, 16, 128), dtype=jnp.float32)
    out1 = jax.block_until_ready(divergence_forward(x1, [0, 1], 2))
    ref1 = _reference_forward(x1, [0, 1], 2)
    assert out1.shape == (2, 1, 16, 128)
    assert jnp.allclose(out1, ref1, atol=1e-5, rtol=1e-5), "mismatch (merged path)"

    # Test 2: split-channel path + H-tiled halo path (B=1, forced h_tile=16).
    x2 = jax.random.normal(k2, (1, 4, 32, 256), dtype=jnp.float32)
    out2 = jax.block_until_ready(divergence_forward(x2, [1, 3], 2, h_tile=16))
    ref2 = _reference_forward(x2, [1, 3], 2)
    assert out2.shape == (1, 1, 32, 256)
    assert jnp.allclose(out2, ref2, atol=1e-5, rtol=1e-5), "mismatch (tiled path)"

    # Test 3: bf16 inputs (f32 accumulation in-kernel, single cast at the store).
    x3 = jax.random.normal(k3, (2, 4, 16, 128), dtype=jnp.float32).astype(jnp.bfloat16)
    out3 = jax.block_until_ready(divergence_forward(x3, [0, 1], 2))
    ref3 = _reference_forward(x3, [0, 1], 2)
    assert out3.shape == (2, 1, 16, 128)
    assert jnp.allclose(out3.astype(jnp.float32), ref3.astype(jnp.float32),
                        atol=3e-2, rtol=3e-2), "mismatch (bf16 path)"

    print("KERNEL_OK")
</pallas_src>

<mosaic_0001>
module attributes {stable_mosaic.version = 11 : i64} {
  func.func @kernel(%arg0: i32, %arg1: i32, %arg2: memref<1x3x16x128xf32, #tpu.memory_space<vmem>>, %arg3: memref<1x1x16x128xf32, #tpu.memory_space<vmem>>) attributes {dimension_semantics = [#tpu.dimension_semantics<parallel>, #tpu.dimension_semantics<parallel>], iteration_bounds = array<i64: 2, 1>, scalar_prefetch = 0 : i64, scratch_operands = 0 : i64, tpu.core_type = #tpu.core_type<tc>, window_params = [{transform_indices = @transform_0, window_bounds = array<i64: 1, 3, 16, 128>}, {transform_indices = @transform_1, window_bounds = array<i64: 1, 1, 16, 128>}]} {
    %c0 = arith.constant 0 : index
    %c0_0 = arith.constant 0 : index
    %c0_1 = arith.constant 0 : index
    %c0_2 = arith.constant 0 : index
    %0 = vector.load %arg2[%c0, %c0_0, %c0_1, %c0_2] : memref<1x3x16x128xf32, #tpu.memory_space<vmem>>, vector<1x1x16x128xf32>
    %1 = vector.shape_cast %0 : vector<1x1x16x128xf32> to vector<1x16x128xf32>
    %c0_3 = arith.constant 0 : index
    %c1 = arith.constant 1 : index
    %c0_4 = arith.constant 0 : index
    %c0_5 = arith.constant 0 : index
    %2 = vector.load %arg2[%c0_3, %c1, %c0_4, %c0_5] : memref<1x3x16x128xf32, #tpu.memory_space<vmem>>, vector<1x1x16x128xf32>
    %3 = vector.shape_cast %2 : vector<1x1x16x128xf32> to vector<1x16x128xf32>
    %c0_6 = arith.constant 0 : index
    %c2 = arith.constant 2 : index
    %c0_7 = arith.constant 0 : index
    %c0_8 = arith.constant 0 : index
    %4 = vector.load %arg2[%c0_6, %c2, %c0_7, %c0_8] : memref<1x3x16x128xf32, #tpu.memory_space<vmem>>, vector<1x1x16x128xf32>
    %5 = vector.shape_cast %4 : vector<1x1x16x128xf32> to vector<1x16x128xf32>
    %6 = vector.extract_strided_slice %1 {offsets = [0, 0, 0], sizes = [1, 1, 128], strides = [1, 1, 1]} : vector<1x16x128xf32> to vector<1x1x128xf32>
    %7 = vector.extract_strided_slice %1 {offsets = [0, 15, 0], sizes = [1, 1, 128], strides = [1, 1, 1]} : vector<1x16x128xf32> to vector<1x1x128xf32>
    %8 = tpu.iota {dimensions = array<i32: 1>} : vector<1x16x1xi32>
    %c15_i32 = arith.constant 15 : i32
    %9 = vector.broadcast %c15_i32 : i32 to vector<1x16x1xi32>
    %10 = arith.cmpi eq, %8, %9 : vector<1x16x1xi32>
    %c15_i32_9 = arith.constant 15 : i32
    %11 = tpu.dynamic_rotate %1 by %c15_i32_9 dim 1 : vector<1x16x128xf32>, i32 -> vector<1x16x128xf32>
    %12 = vector.shape_cast %10 : vector<1x16x1xi1> to vector<1x16x1xi1>
    %13 = vector.broadcast %12 : vector<1x16x1xi1> to vector<1x16x128xi1>
    %14 = vector.shape_cast %7 : vector<1x1x128xf32> to vector<1x1x128xf32>
    %15 = vector.broadcast %14 : vector<1x1x128xf32> to vector<1x16x128xf32>
    %16 = arith.select %13, %15, %11 : vector<1x16x128xi1>, vector<1x16x128xf32>
    %c0_i32 = arith.constant 0 : i32
    %17 = vector.broadcast %c0_i32 : i32 to vector<1x16x1xi32>
    %18 = arith.cmpi eq, %8, %17 : vector<1x16x1xi32>
    %c1_i32 = arith.constant 1 : i32
    %19 = tpu.dynamic_rotate %1 by %c1_i32 dim 1 : vector<1x16x128xf32>, i32 -> vector<1x16x128xf32>
    %20 = vector.shape_cast %18 : vector<1x16x1xi1> to vector<1x16x1xi1>
    %21 = vector.broadcast %20 : vector<1x16x1xi1> to vector<1x16x128xi1>
    %22 = vector.shape_cast %6 : vector<1x1x128xf32> to vector<1x1x128xf32>
    %23 = vector.broadcast %22 : vector<1x1x128xf32> to vector<1x16x128xf32>
    %24 = arith.select %21, %23, %19 : vector<1x16x128xi1>, vector<1x16x128xf32>
    %c0_i32_10 = arith.constant 0 : i32
    %25 = vector.broadcast %c0_i32_10 : i32 to vector<1x16x1xi32>
    %26 = arith.addi %25, %8 : vector<1x16x1xi32>
    %c0_i32_11 = arith.constant 0 : i32
    %27 = vector.broadcast %c0_i32_11 : i32 to vector<1x16x1xi32>
    %28 = arith.cmpi eq, %26, %27 : vector<1x16x1xi32>
    %c15_i32_12 = arith.constant 15 : i32
    %29 = vector.broadcast %c15_i32_12 : i32 to vector<1x16x1xi32>
    %30 = arith.cmpi eq, %26, %29 : vector<1x16x1xi32>
    %31 = arith.ori %28, %30 : vector<1x16x1xi1>
    %cst = arith.constant 1.000000e+00 : f32
    %cst_13 = arith.constant 5.000000e-01 : f32
    %32 = vector.broadcast %cst : f32 to vector<1x16x1xf32>
    %33 = vector.broadcast %cst_13 : f32 to vector<1x16x1xf32>
    %34 = arith.select %31, %32, %33 : vector<1x16x1xi1>, vector<1x16x1xf32>
    %35 = arith.subf %16, %24 : vector<1x16x128xf32>
    %36 = vector.broadcast %34 : vector<1x16x1xf32> to vector<1x16x128xf32>
    %37 = arith.mulf %35, %36 : vector<1x16x128xf32>
    %38 = tpu.iota {dimensions = array<i32: 2>} : vector<1x1x128xi32>
    %c127_i32 = arith.constant 127 : i32
    %39 = vector.broadcast %c127_i32 : i32 to vector<1x1x128xi32>
    %40 = arith.cmpi eq, %38, %39 : vector<1x1x128xi32>
    %41 = vector.extract_strided_slice %3 {offsets = [0, 0, 127], sizes = [1, 16, 1], strides = [1, 1, 1]} : vector<1x16x128xf32> to vector<1x16x1xf32>
    %c127_i32_14 = arith.constant 127 : i32
    %42 = tpu.dynamic_rotate %3 by %c127_i32_14 dim 2 : vector<1x16x128xf32>, i32 -> vector<1x16x128xf32>
    %43 = vector.shape_cast %40 : vector<1x1x128xi1> to vector<1x1x128xi1>
    %44 = vector.broadcast %43 : vector<1x1x128xi1> to vector<1x16x128xi1>
    %45 = vector.shape_cast %41 : vector<1x16x1xf32> to vector<1x16x1xf32>
    %46 = vector.broadcast %45 : vector<1x16x1xf32> to vector<1x16x128xf32>
    %47 = arith.select %44, %46, %42 : vector<1x16x128xi1>, vector<1x16x128xf32>
    %c0_i32_15 = arith.constant 0 : i32
    %48 = vector.broadcast %c0_i32_15 : i32 to vector<1x1x128xi32>
    %49 = arith.cmpi eq, %38, %48 : vector<1x1x128xi32>
    %50 = vector.extract_strided_slice %3 {offsets = [0, 0, 0], sizes = [1, 16, 1], strides = [1, 1, 1]} : vector<1x16x128xf32> to vector<1x16x1xf32>
    %c1_i32_16 = arith.constant 1 : i32
    %51 = tpu.dynamic_rotate %3 by %c1_i32_16 dim 2 : vector<1x16x128xf32>, i32 -> vector<1x16x128xf32>
    %52 = vector.shape_cast %49 : vector<1x1x128xi1> to vector<1x1x128xi1>
    %53 = vector.broadcast %52 : vector<1x1x128xi1> to vector<1x16x128xi1>
    %54 = vector.shape_cast %50 : vector<1x16x1xf32> to vector<1x16x1xf32>
    %55 = vector.broadcast %54 : vector<1x16x1xf32> to vector<1x16x128xf32>
    %56 = arith.select %53, %55, %51 : vector<1x16x128xi1>, vector<1x16x128xf32>
    %c0_i32_17 = arith.constant 0 : i32
    %57 = vector.broadcast %c0_i32_17 : i32 to vector<1x1x128xi32>
    %58 = arith.cmpi eq, %38, %57 : vector<1x1x128xi32>
    %c127_i32_18 = arith.constant 127 : i32
    %59 = vector.broadcast %c127_i32_18 : i32 to vector<1x1x128xi32>
    %60 = arith.cmpi eq, %38, %59 : vector<1x1x128xi32>
    %61 = arith.ori %58, %60 : vector<1x1x128xi1>
    %cst_19 = arith.constant 1.000000e+00 : f32
    %cst_20 = arith.constant 5.000000e-01 : f32
    %62 = vector.broadcast %cst_19 : f32 to vector<1x1x128xf32>
    %63 = vector.broadcast %cst_20 : f32 to vector<1x1x128xf32>
    %64 = arith.select %61, %62, %63 : vector<1x1x128xi1>, vector<1x1x128xf32>
    %65 = arith.subf %47, %56 : vector<1x16x128xf32>
    %66 = vector.broadcast %64 : vector<1x1x128xf32> to vector<1x16x128xf32>
    %67 = arith.mulf %65, %66 : vector<1x16x128xf32>
    %68 = arith.addf %37, %67 : vector<1x16x128xf32>
    %69 = arith.mulf %68, %5 : vector<1x16x128xf32>
    %c0_21 = arith.constant 0 : index
    %c0_22 = arith.constant 0 : index
    %c0_23 = arith.constant 0 : index
    %c0_24 = arith.constant 0 : index
    %70 = vector.load %arg3[%c0_21, %c0_22, %c0_23, %c0_24] : memref<1x1x16x128xf32, #tpu.memory_space<vmem>>, vector<1x1x16x128xf32>
    %71 = vector.shape_cast %70 : vector<1x1x16x128xf32> to vector<1x16x128xf32>
    %72 = vector.shape_cast %69 : vector<1x16x128xf32> to vector<1x1x16x128xf32>
    tpu.vector_store %arg3[%c0_21, %c0_22, %c0_23, %c0_24], %72 {strides = array<i32>} : memref<1x1x16x128xf32, #tpu.memory_space<vmem>>, vector<1x1x16x128xf32>,
    return
  }
  func.func @transform_0(%arg0: i32, %arg1: i32) -> (i32, i32, i32, i32) {
    %c0_i32 = arith.constant 0 : i32
    %c0_i32_0 = arith.constant 0 : i32
    %c0_i32_1 = arith.constant 0 : i32
    return %arg0, %c0_i32, %arg1, %c0_i32_0 : i32, i32, i32, i32
  }
  func.func @transform_1(%arg0: i32, %arg1: i32) -> (i32, i32, i32, i32) {
    %c0_i32 = arith.constant 0 : i32
    %c0_i32_0 = arith.constant 0 : i32
    %c0_i32_1 = arith.constant 0 : i32
    return %arg0, %c0_i32, %arg1, %c0_i32_0 : i32, i32, i32, i32
  }
}

</mosaic_0001>

<llo_original>
// kernel: tpu_custom_call.1
$region0: #{tpu_custom_call.1}
  #allocation0 [shape = 'u32[]', space=smem, size = 0x4, offset = 0x4, fixed_abs, tag = 'smem constant byte address 0x4 - core index']
  #allocation1 [shape = 'u32[144,128]{1,0:T(1,128)}', space=vmem, size = 0x12000, scoped, tag = 'internal scratch']
  %s0 = inlined_call_operand.hbm [shape: f32[2,4,16,128], index: 0, kind: input, shape index: {}]
  %s1 = inlined_call_operand.hbm [shape: f32[2,1,16,128], index: 1, kind: output, shape index: {}]
  %s2 = sld [smem:[#allocation0]]
  $region41: #{tpu_custom_call.1} parent=0
    _
  %s4 = ssub.s32 1, %s2
  %s5 = scalar_select 0, %s4, %s2
  $region1: #{tpu_custom_call.1} parent=0
    #allocation2 [shape = 'u8[49152]{0}', space=vmem, size = 0xc000, scoped, tag = 'input window, operand 0']
    #allocation3 [shape = 's32[2]{0}', space=sflag, size = 0x8, scoped, tag = 'scoped memory for tpu_custom_call.1']
    #allocation4 [shape = 's32[2]{0}', space=sflag, size = 0x8, scoped, tag = 'scoped memory for tpu_custom_call.1']
    #allocation5 [shape = 'u8[16384]{0}', space=vmem, size = 0x4000, scoped, tag = 'output window, operand 0']
    %6 = vsyncpa [#allocation3], 0
    %s7 = scalar_lea.sflag [#allocation3], 1
    %8 = vsyncpa %s7, 0
    %9 = vsyncpa [#allocation4], 0
    %s10 = scalar_lea.sflag [#allocation4], 1
    %11 = vsyncpa %s10, 0
    loop: start=0, step=1, limit=4
    $region2: #{tpu_custom_call.1} parent=1 // loop_pre_header
      _
    $region3: #{tpu_custom_call.1} parent=1 // loop_header
      %s13 = sphi 0, %s17
      %p14 = scmp.ge.s32.totalorder %s13, 4
      %s20 = sphi 0, %s32
      %s21 = sphi 0, %s28
      %s22 = sphi 0, %s20
      %s23 = sphi 0, %s21
      %s24 = sphi 0, %s22
      %s25 = sphi 0, %s23
      %s37 = sphi 0, %s39
      %s40 = sphi 0, %s37
      %s41 = sphi 0, %s40
      %s57 = sphi 0, %s41
      %s65 = sphi 0, %s67
      %s68 = sphi 0, %s65
      %s69 = sphi 0, %s68
      %s85 = sphi 0, %s69
    $region4: #{tpu_custom_call.1} parent=1 // loop_header_branch
      %16 = sbr.rel (%p14) target = $region8
    $region5: #{tpu_custom_call.1} parent=1 // loop_body
      %s18 = ssub.s32 %s13, 1
      %s19 = ssub.s32 %s13, 2
      %s26 = sadd.s32 1, %s21
      %p27 = scmp.ge.s32.totalorder %s26, 1
      %s28 = scalar_select %p27, 0, %s26
      %s29 = sadd.s32 1, %s20
      %s30 = scalar_select %p27, %s29, %s20
      %p31 = scmp.ge.s32.totalorder %s30, 2
      %s32 = scalar_select %p31, 0, %s30
      %s33 = ssub.s32 %s20, %s32
      %s34 = ssub.s32 %s21, %s28
      %s35 = sor.u32 %s33, %s34
      %p36 = scmp.eq.s32.totalorder %s35, 0
      %s38 = sadd.s32 %s37, 1
      %s39 = scalar_select %p36, %s37, %s38
      %p42 = pneg %p36
      %p43 = scmp.eq.s32.totalorder %s13, 1
      %p44 = por %p42, %p43
      %p45 = scmp.ne.s32.totalorder %s37, %s40
      %p46 = scmp.eq.s32.totalorder %s13, 0
      %p47 = por %p45, %p46
      %p48 = scmp.ne.s32.totalorder %s37, %s40
      %p49 = scmp.eq.s32.totalorder %s18, 1
      %p50 = por %p48, %p49
      %p51 = scmp.ne.s32.totalorder %s40, %s41
      %p52 = scmp.eq.s32.totalorder %s18, 0
      %p53 = por %p51, %p52
      %p54 = scmp.ne.s32.totalorder %s40, %s41
      %p55 = scmp.eq.s32.totalorder %s19, 1
      %p56 = por %p54, %p55
      %p58 = scmp.ne.s32.totalorder %s41, %s57
      %p59 = scmp.eq.s32.totalorder %s19, 0
      %p60 = por %p58, %p59
      %s61 = ssub.s32 %s20, %s32
      %s62 = ssub.s32 %s21, %s28
      %s63 = sor.u32 %s61, %s62
      %p64 = scmp.eq.s32.totalorder %s63, 0
      %s66 = sadd.s32 %s65, 1
      %s67 = scalar_select %p64, %s65, %s66
      %p70 = pneg %p64
      %p71 = scmp.eq.s32.totalorder %s13, 1
      %p72 = por %p70, %p71
      %p73 = scmp.ne.s32.totalorder %s65, %s68
      %p74 = scmp.eq.s32.totalorder %s13, 0
      %p75 = por %p73, %p74
      %p76 = scmp.ne.s32.totalorder %s65, %s68
      %p77 = scmp.eq.s32.totalorder %s18, 1
      %p78 = por %p76, %p77
      %p79 = scmp.ne.s32.totalorder %s68, %s69
      %p80 = scmp.eq.s32.totalorder %s18, 0
      %p81 = por %p79, %p80
      %p82 = scmp.ne.s32.totalorder %s68, %s69
      %p83 = scmp.eq.s32.totalorder %s19, 1
      %p84 = por %p82, %p83
      %p86 = scmp.ne.s32.totalorder %s69, %s85
      %p87 = scmp.eq.s32.totalorder %s19, 0
      %p88 = por %p86, %p87
      %p89 = scmp.le.s32.totalorder 1, %s13
      %p90 = scmp.lt.s32.totalorder %s13, 3
      %p91 = pnand %p89, %p90
      %p92 = pneg %p91
      // Predicated region
      $region9: #{tpu_custom_call.1} parent=5 // pred_check
        _
      $region10: #{tpu_custom_call.1} parent=5 // pred_check_branch
        %94 = sbr.rel (%p91) target = $region12
      $region11: #{tpu_custom_call.1} parent=5 // pred_region
        %s95 = ssub.s32 %s13, 1
      $region12: #{tpu_custom_call.1} parent=5 // pred_fallthru
        _
      %p96 = scmp.lt.s32.totalorder %s13, 2
      // Predicated region
      $region13: #{tpu_custom_call.1} parent=5 // pred_check
        %p97 = pneg %p96
      $region14: #{tpu_custom_call.1} parent=5 // pred_check_branch
        %99 = sbr.rel (%p97) target = $region16
      $region15: #{tpu_custom_call.1} parent=5 // pred_region
        // Predicated region
        $region17: #{tpu_custom_call.1} parent=15 // pred_check
          %p100 = pneg %p47
        $region18: #{tpu_custom_call.1} parent=15 // pred_check_branch
          %102 = sbr.rel (%p100) target = $region20
        $region19: #{tpu_custom_call.1} parent=15 // pred_region
          %s103 = sand.u32 %s37, 1
          %s104 = scalar_lea.sflag [#allocation3], %s103
          %s105 = sand.u32 %s37, 1
          %s106 = smul.addr %s105, 48
          %s107 = scalar_lea.vmem [#allocation2], %s106
          %s108 = smul.u32 2, %s21
          %s110 = ssub.s32 768, 768
          %111 = vsyncadd %s104, %s110
          %s112 = smul.addr %s20, 8
          %s113 = sadd.s32 %s108, %s112
          %s114 = smul.addr %s113, 128
          %s115 = scalar_lea.hbm %s0, %s114
          %s116 = sshll.u32 %s107, 4
          %s117 = int_to_ptr.vmem [resolvable:$true] %s116
          %122 = dma.hbm_to_vmem [thread:$0]  %s115, 768, %s117, %s104, 128, 128, 8
        $region20: #{tpu_custom_call.1} parent=15 // pred_fallthru
          _
      $region16: #{tpu_custom_call.1} parent=5 // pred_fallthru
        _
      %p123 = scmp.le.s32.totalorder 1, %s13
      %p124 = scmp.lt.s32.totalorder %s13, 3
      %p125 = pnand %p123, %p124
      %p126 = pneg %p125
      // Predicated region
      $region21: #{tpu_custom_call.1} parent=5 // pred_check
        _
      $region22: #{tpu_custom_call.1} parent=5 // pred_check_branch
        %128 = sbr.rel (%p125) target = $region24
      $region23: #{tpu_custom_call.1} parent=5 // pred_region
        %s129 = ssub.s32 %s13, 1
        %s130 = sand.u32 %s40, 1
        %s131 = scalar_lea.sflag [#allocation3], %s130
        %s132 = sand.u32 %s40, 1
        %s133 = smul.addr %s132, 48
        %s134 = scalar_lea.vmem [#allocation2], %s133
        // Predicated region
        $region25: #{tpu_custom_call.1} parent=23 // pred_check
          %p135 = pneg %p53
        $region26: #{tpu_custom_call.1} parent=23 // pred_check_branch
          %137 = sbr.rel (%p135) target = $region28
        $region27: #{tpu_custom_call.1} parent=23 // pred_region
          %138 = dma.done %s131, 768
        $region28: #{tpu_custom_call.1} parent=23 // pred_fallthru
          _
        %s139 = sand.u32 %s40, 1
        %s140 = scalar_lea.sflag [#allocation3], %s139
        %s141 = sand.u32 %s40, 1
        %s142 = smul.addr %s141, 48
        %s143 = scalar_lea.vmem [#allocation2], %s142
        %p144 = pneg %p53
        %p145 = pneg %p50
        %p146 = pneg %p81
        %p147 = pneg %p78
        %s148 = sand.u32 %s68, 1
        %s149 = scalar_lea.sflag [#allocation4], %s148
        %s150 = sand.u32 %s68, 1
        %s151 = smul.addr %s150, 16
        %s152 = scalar_lea.vmem [#allocation5], %s151
        %s153 = smul.u32 2, %s23
        %s154 = smul.u32 2, %s23
        %v155 = vld [vmem:[%s134] sm:$0xff]
        %v156 = vld [vmem:[%s134 + $0x8] sm:$0xff]
        %s157 = scalar_lea.vmem %s134, 16 [#allocation2]
        %v158 = vld [vmem:[%s157] sm:$0xff]
        %v159 = vld [vmem:[%s157 + $0x8] sm:$0xff]
        %s160 = scalar_lea.vmem %s134, 32 [#allocation2]
        %v161 = vld [vmem:[%s160] sm:$0xff]
        %v162 = vld [vmem:[%s160 + $0x8] sm:$0xff]
        %v163 = vlaneseq
        %v164 = vshrl.u32 %v163, 7
        %v165 = vadd.s32 %v164, 8
        %vm166 = vcmp.eq.s32.totalorder %v164, 15
        %vm167 = vcmp.eq.s32.totalorder %v165, 15
        %v168 = vrot.slane %v155, 1
        %v169 = vrot.slane %v156, 1
        %vm170 = vcmp.lt.s32.totalorder %v164, 7
        %v171 = vsel %vm170, %v168, %v169
        %v172 = vsel %vm170, %v169, %v168
        %v173 = vsel %vm166, 1, 0
        %v174 = vsel %vm167, 1, 0
        %vm175 = vcmp.eq.s32.totalorder %v173, 1
        %vm176 = vcmp.eq.s32.totalorder %v174, 1
        %v177 = vlaneseq
        %v178 = vshrl.u32 %v177, 7
        %v179 = vsub.s32 7, %v178
        %v180 = vrot.slane %v156, %v179
        %v181 = vsel %vm175, %v180, %v171
        %v182 = vsel %vm176, %v180, %v172
        %vm183 = vcmp.eq.s32.totalorder %v164, 0
        %vm184 = vcmp.eq.s32.totalorder %v165, 0
        %v185 = vrot.slane %v155, 7
        %v186 = vrot.slane %v156, 7
        %vm187 = vcmp.lt.s32.totalorder %v164, 1
        %v188 = vsel %vm187, %v185, %v186
        %v189 = vsel %vm187, %v186, %v185
        %v190 = vsel %vm183, 1, 0
        %v191 = vsel %vm184, 1, 0
        %vm192 = vcmp.eq.s32.totalorder %v190, 1
        %vm193 = vcmp.eq.s32.totalorder %v191, 1
        %v194 = vlaneseq
        %v195 = vshrl.u32 %v194, 7
        %v196 = vsub.s32 0, %v195
        %v197 = vrot.slane %v155, %v196
        %v198 = vsel %vm192, %v197, %v189
        %v199 = vsel %vm193, %v197, %v188
        %vm200 = vmor %vm183, %vm166
        %vm201 = vmor %vm184, %vm167
        %v202 = vsel %vm200, 1.0, 0.5
        %v203 = vsel %vm201, 1.0, 0.5
        %v204 = vsub.f32 %v181, %v198
        %v205 = vsub.f32 %v182, %v199
        %v206 = vmul.f32 %v204, %v202
        %v207 = vmul.f32 %v205, %v203
        %v208 = vlaneseq
        %v209 = vand.u32 %v208, 127
        %vm210 = vcmp.eq.s32.totalorder %v209, 127
        %211 = vrot.lane.b32.xlu0 %v158, 127
        %v212 = vpop.permute.xlu0 %211
        %213 = vrot.lane.b32.xlu0 %v159, 127
        %v214 = vpop.permute.xlu0 %213
        %v215 = vsel %vm210, 1, 0
        %vm216 = vcmp.eq.s32.totalorder %v215, 1
        %218 = vset.pattern.permute.xlu0 127
        %219 = vperm.xlu0 %218, %v158
        %v220 = vpop.permute.xlu0 %219
        %223 = vset.pattern.permute.xlu0 127
        %224 = vperm.xlu0 %223, %v159
        %v225 = vpop.permute.xlu0 %224
        %v227 = vsel %vm216, %v220, %v212
        %v228 = vsel %vm216, %v225, %v214
        %vm229 = vcmp.eq.s32.totalorder %v209, 0
        %230 = vrot.lane.b32.xlu0 %v158, 1
        %v231 = vpop.permute.xlu0 %230
        %232 = vrot.lane.b32.xlu0 %v159, 1
        %v233 = vpop.permute.xlu0 %232
        %v234 = vsel %vm229, 1, 0
        %vm235 = vcmp.eq.s32.totalorder %v234, 1
        %236 = vset.pattern.permute.xlu0 0
        %237 = vperm.xlu0 %236, %v158
        %v238 = vpop.permute.xlu0 %237
        %240 = vset.pattern.permute.xlu0 0
        %241 = vperm.xlu0 %240, %v159
        %v242 = vpop.permute.xlu0 %241
        %v244 = vsel %vm235, %v238, %v231
        %v245 = vsel %vm235, %v242, %v233
        %vm246 = vmor %vm229, %vm210
        %v247 = vsel %vm246, 1.0, 0.5
        %v248 = vsub.f32 %v227, %v244
        %v249 = vsub.f32 %v228, %v245
        %v250 = vmul.f32 %v248, %v247
        %v251 = vmul.f32 %v249, %v247
        %v252 = vadd.f32 %v206, %v250
        %v253 = vadd.f32 %v207, %v251
        %v254 = vmul.f32 %v252, %v161
        %v255 = vmul.f32 %v253, %v162
        %256 = vst [vmem:[%s152] sm:$0xff] %v254
        %257 = vst [vmem:[%s152 + $0x8] sm:$0xff] %v255
        %s258 = sand.u32 %s68, 1
        %s259 = scalar_lea.sflag [#allocation4], %s258
        %s260 = sand.u32 %s68, 1
        %s261 = smul.addr %s260, 16
        %s262 = scalar_lea.vmem [#allocation5], %s261
        // Predicated region
        $region29: #{tpu_custom_call.1} parent=23 // pred_check
          %p263 = pneg %p78
        $region30: #{tpu_custom_call.1} parent=23 // pred_check_branch
          %265 = sbr.rel (%p263) target = $region32
        $region31: #{tpu_custom_call.1} parent=23 // pred_region
          %s266 = smul.u32 2, %s23
          %s268 = ssub.s32 256, 256
          %269 = vsyncadd %s259, %s268
          %s270 = smul.addr %s22, 2
          %s271 = sadd.s32 %s266, %s270
          %s272 = smul.addr %s271, 128
          %s273 = scalar_lea.hbm %s1, %s272
          %s274 = sshll.u32 %s262, 4
          %s275 = int_to_ptr.vmem [resolvable:$true] %s274
          %280 = dma.vmem_to_hbm [thread:$0]  %s275, 256, %s273, %s259, 128, 128, 8
        $region32: #{tpu_custom_call.1} parent=23 // pred_fallthru
          _
      $region24: #{tpu_custom_call.1} parent=5 // pred_fallthru
        _
      %p281 = scmp.le.s32.totalorder 2, %s13
      // Predicated region
      $region33: #{tpu_custom_call.1} parent=5 // pred_check
        %p282 = pneg %p281
      $region34: #{tpu_custom_call.1} parent=5 // pred_check_branch
        %284 = sbr.rel (%p282) target = $region36
      $region35: #{tpu_custom_call.1} parent=5 // pred_region
        %s285 = ssub.s32 %s13, 2
        // Predicated region
        $region37: #{tpu_custom_call.1} parent=35 // pred_check
          %p286 = pneg %p84
        $region38: #{tpu_custom_call.1} parent=35 // pred_check_branch
          %288 = sbr.rel (%p286) target = $region40
        $region39: #{tpu_custom_call.1} parent=35 // pred_region
          %s289 = sand.u32 %s69, 1
          %s290 = scalar_lea.sflag [#allocation4], %s289
          %s291 = sand.u32 %s69, 1
          %s292 = smul.addr %s291, 16
          %s293 = scalar_lea.vmem [#allocation5], %s292
          %294 = dma.done %s290, 256
        $region40: #{tpu_custom_call.1} parent=35 // pred_fallthru
          _
      $region36: #{tpu_custom_call.1} parent=5 // pred_fallthru
        _
    $region6: #{tpu_custom_call.1} parent=1 // loop_footer
      %s17 = sadd.s32 1, %s13
    $region7: #{tpu_custom_call.1} parent=1 // loop_footer_branch
      %12 = sbr.rel target = $region3
    $region8: #{tpu_custom_call.1} parent=1 // loop_exit
      _
    %295 = vsyncpa [#allocation3], 1
    %s296 = scalar_lea.sflag [#allocation3], 1
    %297 = vsyncpa %s296, 1
    %298 = vsyncpa [#allocation4], 1
    %s299 = scalar_lea.sflag [#allocation4], 1
    %300 = vsyncpa %s299, 1

</llo_original>
